<compile_context>
chip_gen: v7x
topology: tpu7x:2x2x1
jax: 0.10.0
libtpu: 0.0.40
codegen_flags: <defaults>
</compile_context>

<pallas_src>
import functools

import jax
import jax.numpy as jnp
from jax import lax
from jax.experimental import pallas as pl
from jax.experimental.pallas import tpu as pltpu


def _round_up(x, a):
    return (x + a - 1) // a * a


def _pick_tile(dim, want, align):
    """Largest multiple of `align` that divides `dim` and is <= `want`;
    `dim` itself if it is already <= `want`. `dim` is pre-padded to a multiple
    of `align`, so the divisor search always succeeds (worst case `align`)."""
    if dim <= want:
        return dim
    t = (want // align) * align
    while t >= align:
        if dim % t == 0:
            return t
        t -= align
    return dim  # unreachable once dim is align-padded


def _cl_kernel(h1_ref, h2t_ref, h2aug_ref, w_ref,
               ce_ref, colsum_ref, sq_ref,
               m_scr, l_scr, wh2_scr,
               *, scale, tm, pad_m, k, h2_resident):
    j = pl.program_id(1)
    nm = pl.num_programs(1)

    h1_raw = h1_ref[...]                                   # (TN, K) input dtype
    h1f = h1_raw.astype(jnp.float32)
    # Fold /bit/0.3 into one multiply on the small (TN, K) operand; cast back
    # so bf16 inputs keep the bf16 MXU path.
    h1_scaled = h1f * jnp.float32(scale)                   # f32, reused below
    h1_mm = h1_scaled.astype(h1_raw.dtype)

    if h2_resident:
        # h2 lives fully in VMEM (DMA'd from HBM once); slice the current M tile.
        col0 = pl.multiple_of(j * tm, 128)
        h2t_tile = h2t_ref[:, pl.ds(col0, tm)]             # (K,  TM)
        h2aug_tile = h2aug_ref[pl.ds(col0, tm), :]         # (TM, K+1)
    else:
        h2t_tile = h2t_ref[...]
        h2aug_tile = h2aug_ref[...]

    # logits tile on the MXU in natural (contract, out) orientation.
    logits = lax.dot_general(
        h1_mm, h2t_tile,
        dimension_numbers=(((1,), (0,)), ((), ())),
        preferred_element_type=jnp.float32)                # (TN, TM) f32

    if pad_m:
        # Zero-padded h2 columns sit at the tail of the last M tile; mask them
        # out of the softmax. This branch is a compile-time no-op when M is
        # already a multiple of 128.
        col_ids = lax.broadcasted_iota(jnp.int32, logits.shape, 1)
        valid = (col_ids < (tm - pad_m)) | (j < nm - 1)
        logits = jnp.where(valid, logits, jnp.float32(-1e30))

    # Soft-label contractions on the (otherwise idle) MXU instead of (TN,TM)
    # VPU multiplies + lane reductions:
    #   wh2[:, :K] = sum_j w_ij * h2_jk      (later -> s_i via a (TN,K) rowsum)
    #   wh2[:,  K] = sum_j w_ij              (row weight mass via ones column)
    wh2 = lax.dot_general(
        w_ref[...], h2aug_tile,
        dimension_numbers=(((1,), (0,)), ((), ())),
        preferred_element_type=jnp.float32)                # (TN, K+1) f32

    # ---- per-N-tile state init (once per i tile) ----
    @pl.when(j == 0)
    def _():
        m_scr[...] = jnp.full_like(m_scr, -jnp.inf)
        l_scr[...] = jnp.zeros_like(l_scr)
        wh2_scr[...] = jnp.zeros_like(wh2_scr)

    wh2_scr[...] += wh2

    # ---- online log-sum-exp over the M axis ----
    m_prev = m_scr[...]                                    # (TN, 1)
    m_new = jnp.maximum(m_prev, jnp.max(logits, axis=-1, keepdims=True))
    alpha = jnp.exp(m_prev - m_new)
    l_scr[...] = alpha * l_scr[...] + jnp.sum(jnp.exp(logits - m_new),
                                              axis=-1, keepdims=True)
    m_scr[...] = m_new

    # ---- per-N-tile partials, written exactly once per i so the i axis can
    # ---- run in parallel across TensorCores; wrapper does the final reduce.
    @pl.when(j == nm - 1)
    def _():
        lse = m_scr[...] + jnp.log(l_scr[...])             # (TN, 1)
        wh2_acc = wh2_scr[...]                             # (TN, K+1)
        s = jnp.sum(h1_scaled * wh2_acc[:, :k], axis=-1, keepdims=True)
        wsum = wh2_acc[:, k:k + 1]                         # (TN, 1)
        ce_rows = wsum * lse - s                           # (TN, 1)
        ce_ref[...] = jnp.sum(ce_rows).reshape(1, 1, 1)
        colsum_ref[...] = jnp.sum(h1f, axis=0).reshape(1, 1, k)
        sq_ref[...] = jnp.sum(h1f * h1f).reshape(1, 1, 1)


def cl_loss(h1, h2, weighted, bit, *, tn=512, tm=1024, vmem_limit_bytes=None):
    """Pallas implementation of CL.forward(h1, h2, weighted)."""
    n, k = h1.shape
    m, k2 = h2.shape
    assert k == k2 and weighted.shape == (n, m)

    # --- tiling: pad N/M minimally to sublane/lane alignment, then pick the
    # --- largest aligned tiles that divide the padded extents.
    sub32 = min(h1.dtype.itemsize, weighted.dtype.itemsize) < 4
    align_n = 16 if sub32 else 8
    n_pad = _round_up(n, align_n)
    m_pad = _round_up(m, 128)
    pad_n, pad_m = n_pad - n, m_pad - m

    tn = _pick_tile(n_pad, max(tn, align_n), align_n)
    tm = _pick_tile(m_pad, max(tm, 128), 128)

    h1_it = h1.dtype.itemsize
    h2_it = h2.dtype.itemsize
    w_it = weighted.dtype.itemsize

    # Keep h2 fully VMEM-resident (read from HBM once) unless it is huge.
    h2_resident_bytes = 2 * (k * m_pad + m_pad * (k + 1)) * h2_it  # 2x buffered
    h2_resident = h2_resident_bytes <= (16 << 20)

    def vmem_bytes(tn_, tm_):
        h2_bytes = (h2_resident_bytes if h2_resident
                    else 2 * (k * tm_ + tm_ * (k + 1)) * h2_it)
        stream = 2 * (tn_ * tm_ * w_it + tn_ * k * h1_it)    # double-buffered
        temps = 4 * tn_ * tm_ * 4                            # f32 intermediates
        scratch = tn_ * (k + 3) * 4
        return h2_bytes + stream + temps + scratch

    # Shrink tiles until they fit a conservative budget (v7x: 64 MiB physical
    # VMEM per TensorCore), preserving alignment/divisibility.
    budget = 40 << 20
    while vmem_bytes(tn, tm) > budget and tm > 128:
        tm = _pick_tile(m_pad, max(128, (tm // 2) // 128 * 128), 128)
    while vmem_bytes(tn, tm) > budget and tn > align_n:
        tn = _pick_tile(n_pad, max(align_n, (tn // 2) // align_n * align_n),
                        align_n)

    ni, nmj = n_pad // tn, m_pad // tm
    grid = (ni, nmj)
    scale = 1.0 / (float(bit) * 0.3)

    # --- operand prep (one-time XLA ops, amortized over the whole grid) ---
    h1p = h1 if pad_n == 0 else jnp.pad(h1, ((0, pad_n), (0, 0)))
    wp = (weighted if (pad_n == 0 and pad_m == 0)
          else jnp.pad(weighted, ((0, pad_n), (0, pad_m))))
    h2p = h2 if pad_m == 0 else jnp.pad(h2, ((0, pad_m), (0, 0)))
    h2t = h2p.T                                             # (K, m_pad)
    h2aug = jnp.concatenate(                                # (m_pad, K+1)
        [h2p, jnp.ones((m_pad, 1), h2.dtype)], axis=1)

    kernel = functools.partial(_cl_kernel, scale=scale, tm=tm, pad_m=pad_m,
                               k=k, h2_resident=h2_resident)

    if h2_resident:
        h2t_spec = pl.BlockSpec((k, m_pad), lambda i, j: (0, 0))
        h2aug_spec = pl.BlockSpec((m_pad, k + 1), lambda i, j: (0, 0))
        h2_hbm_bytes = (k * m_pad + m_pad * (k + 1)) * h2_it
    else:
        # TODO(synk): very large M falls back to streaming h2 tiles (re-read
        # per N tile); a manual-DMA ring over h2 would remove that traffic.
        h2t_spec = pl.BlockSpec((k, tm), lambda i, j: (0, j))
        h2aug_spec = pl.BlockSpec((tm, k + 1), lambda i, j: (j, 0))
        h2_hbm_bytes = ni * (k * m_pad + m_pad * (k + 1)) * h2_it

    cost = pl.CostEstimate(
        flops=2 * n_pad * m_pad * (2 * k + 1),
        transcendentals=n_pad * m_pad,
        bytes_accessed=(n_pad * k * h1_it + n_pad * m_pad * w_it
                        + h2_hbm_bytes + ni * (k + 2) * 4))

    if vmem_limit_bytes is None:
        vmem_limit_bytes = min(max(vmem_bytes(tn, tm) + (8 << 20), 32 << 20),
                               48 << 20)

    ce_p, colsum_p, sq_p = pl.pallas_call(
        kernel,
        out_shape=(jax.ShapeDtypeStruct((ni, 1, 1), jnp.float32),
                   jax.ShapeDtypeStruct((ni, 1, k), jnp.float32),
                   jax.ShapeDtypeStruct((ni, 1, 1), jnp.float32)),
        grid_spec=pltpu.PrefetchScalarGridSpec(
            num_scalar_prefetch=0,
            grid=grid,
            in_specs=[
                pl.BlockSpec((tn, k), lambda i, j: (i, 0)),    # h1 tile
                h2t_spec,                                      # h2^T (resident)
                h2aug_spec,                                    # [h2 | 1]
                pl.BlockSpec((tn, tm), lambda i, j: (i, j)),   # weighted tile
            ],
            out_specs=(
                pl.BlockSpec((1, 1, 1), lambda i, j: (i, 0, 0)),   # CE partial
                pl.BlockSpec((1, 1, k), lambda i, j: (i, 0, 0)),   # col sums
                pl.BlockSpec((1, 1, 1), lambda i, j: (i, 0, 0)),   # sum(h1^2)
            ),
            scratch_shapes=[
                pltpu.VMEM((tn, 1), jnp.float32),       # running row max
                pltpu.VMEM((tn, 1), jnp.float32),       # running row sum-exp
                pltpu.VMEM((tn, k + 1), jnp.float32),   # running [w@h2 | Σw]
            ],
        ),
        compiler_params=pltpu.CompilerParams(
            # N-tile partial outputs -> i is safely parallel (2 TCs on v7x);
            # the M reduction axis stays arbitrary/innermost.
            dimension_semantics=("parallel", "arbitrary"),
            vmem_limit_bytes=vmem_limit_bytes),
        cost_estimate=cost,
    )(h1p, h2t, h2aug, wp)

    # --- tiny final reduction over the ni partials (negligible XLA work) ---
    ce = jnp.sum(ce_p) / n
    balance = jnp.sum(colsum_p, axis=(0, 1)) / n             # (K,)
    reg = jnp.mean(balance * balance) - jnp.sum(sq_p) / (n * k)
    return ce + reg


def _cl_loss_ref(h1, h2, weighted, bit):
    h1 = h1.astype(jnp.float32)
    h2 = h2.astype(jnp.float32)
    w = weighted.astype(jnp.float32)
    logits = jnp.einsum('ik,jk->ij', h1, h2) / bit / 0.3
    log_probs = jax.nn.log_softmax(logits, axis=-1)
    ce = -jnp.mean(jnp.sum(w * log_probs, axis=-1))
    balance = jnp.sum(h1, axis=0) / h1.shape[0]
    reg = jnp.mean(balance ** 2) - jnp.mean(h1 ** 2)
    return ce + reg


if __name__ == "__main__":
    key = jax.random.PRNGKey(0)

    def run_case(n, m, k, bit, tn, tm, subkey):
        k1, k2, k3 = jax.random.split(subkey, 3)
        h1 = jax.random.normal(k1, (n, k), dtype=jnp.float32)
        h2 = jax.random.normal(k2, (m, k), dtype=jnp.float32)
        # soft-target rows (non-negative, sum to 1), matching float-target CE
        weighted = jax.nn.softmax(
            jax.random.normal(k3, (n, m), dtype=jnp.float32), axis=-1)
        loss = cl_loss(h1, h2, weighted, bit, tn=tn, tm=tm)
        jax.block_until_ready(loss)
        ref = _cl_loss_ref(h1, h2, weighted, bit)
        assert jnp.allclose(loss, ref, atol=1e-4, rtol=1e-4), (n, m, loss, ref)

    ka, kb = jax.random.split(key)
    # Aligned case: grid = (2, 2), h2 fully VMEM-resident.
    run_case(32, 256, 32, 32, 16, 128, ka)
    # Ragged case: exercises N/M zero-padding + the masked last M tile.
    run_case(28, 200, 32, 32, 16, 128, kb)

    print("KERNEL_OK")
</pallas_src>

<mosaic_0001>
module attributes {stable_mosaic.version = 11 : i64} {
  func.func @_cl_kernel(%arg0: i32, %arg1: i32, %arg2: memref<16x32xf32, #tpu.memory_space<vmem>>, %arg3: memref<32x256xf32, #tpu.memory_space<vmem>>, %arg4: memref<256x33xf32, #tpu.memory_space<vmem>>, %arg5: memref<16x128xf32, #tpu.memory_space<vmem>>, %arg6: memref<1x1x1xf32, #tpu.memory_space<vmem>>, %arg7: memref<1x1x32xf32, #tpu.memory_space<vmem>>, %arg8: memref<1x1x1xf32, #tpu.memory_space<vmem>>, %arg9: memref<16x1xf32, #tpu.memory_space<vmem>>, %arg10: memref<16x1xf32, #tpu.memory_space<vmem>>, %arg11: memref<16x33xf32, #tpu.memory_space<vmem>>) attributes {dimension_semantics = [#tpu.dimension_semantics<parallel>, #tpu.dimension_semantics<arbitrary>], iteration_bounds = array<i64: 2, 2>, scalar_prefetch = 0 : i64, scratch_operands = 3 : i64, tpu.core_type = #tpu.core_type<tc>, window_params = [{transform_indices = @transform_0, window_bounds = array<i64: 16, 32>}, {pipeline_mode = #tpu.pipeline_mode<synchronous>, transform_indices = @transform_1, window_bounds = array<i64: 32, 256>}, {pipeline_mode = #tpu.pipeline_mode<synchronous>, transform_indices = @transform_2, window_bounds = array<i64: 256, 33>}, {transform_indices = @transform_3, window_bounds = array<i64: 16, 128>}, {transform_indices = @transform_4, window_bounds = array<i64: 1, 1, 1>}, {transform_indices = @transform_5, window_bounds = array<i64: 1, 1, 32>}, {transform_indices = @transform_6, window_bounds = array<i64: 1, 1, 1>}]} {
    %c0 = arith.constant 0 : index
    %c0_0 = arith.constant 0 : index
    %0 = vector.load %arg2[%c0, %c0_0] : memref<16x32xf32, #tpu.memory_space<vmem>>, vector<16x32xf32>
    %cst = arith.constant 0.104166664 : f32
    %1 = vector.broadcast %cst : f32 to vector<16x32xf32>
    %2 = arith.mulf %0, %1 : vector<16x32xf32>
    %c128_i32 = arith.constant 128 : i32
    %3 = arith.muli %arg1, %c128_i32 : i32
    %4 = tpu.assume_multiple %3, 128 : i32
    %c0_1 = arith.constant 0 : index
    %5 = arith.index_cast %4 : i32 to index
    %6 = vector.load %arg3[%c0_1, %5] : memref<32x256xf32, #tpu.memory_space<vmem>>, vector<32x128xf32>
    %7 = arith.index_cast %4 : i32 to index
    %c0_2 = arith.constant 0 : index
    %8 = vector.load %arg4[%7, %c0_2] : memref<256x33xf32, #tpu.memory_space<vmem>>, vector<128x33xf32>
    %cst_3 = arith.constant dense<0.000000e+00> : vector<16x128xf32>
    %9 = tpu.matmul %2, %6, %cst_3 {dimension_numbers = #tpu.dot_dimension_numbers<[1], [0], [0], [1], [0, 0, 1, 1], [], []>} : vector<16x32xf32>, vector<32x128xf32>, vector<16x128xf32> -> vector<16x128xf32>
    %c0_4 = arith.constant 0 : index
    %c0_5 = arith.constant 0 : index
    %10 = vector.load %arg5[%c0_4, %c0_5] : memref<16x128xf32, #tpu.memory_space<vmem>>, vector<16x128xf32>
    %cst_6 = arith.constant dense<0.000000e+00> : vector<16x33xf32>
    %11 = tpu.matmul %10, %8, %cst_6 {dimension_numbers = #tpu.dot_dimension_numbers<[1], [0], [0], [1], [0, 0, 1, 1], [], []>} : vector<16x128xf32>, vector<128x33xf32>, vector<16x33xf32> -> vector<16x33xf32>
    %c0_i32 = arith.constant 0 : i32
    %12 = arith.cmpi eq, %arg1, %c0_i32 : i32
    %13 = arith.extui %12 : i1 to i32
    %c0_i32_7 = arith.constant 0 : i32
    %14 = arith.cmpi ne, %13, %c0_i32_7 : i32
    scf.if %14 {
      %cst_23 = arith.constant 0xFF800000 : f32
      %37 = vector.broadcast %cst_23 : f32 to vector<16x1xf32>
      %c0_24 = arith.constant 0 : index
      %c0_25 = arith.constant 0 : index
      %38 = vector.load %arg9[%c0_24, %c0_25] : memref<16x1xf32, #tpu.memory_space<vmem>>, vector<16x1xf32>
      tpu.vector_store %arg9[%c0_24, %c0_25], %37 {strides = array<i32>} : memref<16x1xf32, #tpu.memory_space<vmem>>, vector<16x1xf32>,
      %cst_26 = arith.constant 0.000000e+00 : f32
      %39 = vector.broadcast %cst_26 : f32 to vector<16x1xf32>
      %c0_27 = arith.constant 0 : index
      %c0_28 = arith.constant 0 : index
      %40 = vector.load %arg10[%c0_27, %c0_28] : memref<16x1xf32, #tpu.memory_space<vmem>>, vector<16x1xf32>
      tpu.vector_store %arg10[%c0_27, %c0_28], %39 {strides = array<i32>} : memref<16x1xf32, #tpu.memory_space<vmem>>, vector<16x1xf32>,
      %cst_29 = arith.constant 0.000000e+00 : f32
      %41 = vector.broadcast %cst_29 : f32 to vector<16x33xf32>
      %c0_30 = arith.constant 0 : index
      %c0_31 = arith.constant 0 : index
      %42 = vector.load %arg11[%c0_30, %c0_31] : memref<16x33xf32, #tpu.memory_space<vmem>>, vector<16x33xf32>
      tpu.vector_store %arg11[%c0_30, %c0_31], %41 {strides = array<i32>} : memref<16x33xf32, #tpu.memory_space<vmem>>, vector<16x33xf32>,
    } else {
    }
    %c0_8 = arith.constant 0 : index
    %c0_9 = arith.constant 0 : index
    %15 = vector.load %arg11[%c0_8, %c0_9] : memref<16x33xf32, #tpu.memory_space<vmem>>, vector<16x33xf32>
    %16 = arith.addf %15, %11 : vector<16x33xf32>
    %c0_10 = arith.constant 0 : index
    %c0_11 = arith.constant 0 : index
    %17 = vector.load %arg11[%c0_10, %c0_11] : memref<16x33xf32, #tpu.memory_space<vmem>>, vector<16x33xf32>
    tpu.vector_store %arg11[%c0_10, %c0_11], %16 {strides = array<i32>} : memref<16x33xf32, #tpu.memory_space<vmem>>, vector<16x33xf32>,
    %c0_12 = arith.constant 0 : index
    %c0_13 = arith.constant 0 : index
    %18 = vector.load %arg9[%c0_12, %c0_13] : memref<16x1xf32, #tpu.memory_space<vmem>>, vector<16x1xf32>
    %cst_14 = arith.constant dense<0xFF800000> : vector<16xf32>
    %19 = vector.multi_reduction <maximumf>, %9, %cst_14 [1] : vector<16x128xf32> to vector<16xf32>
    %20 = vector.shape_cast %19 : vector<16xf32> to vector<16x1xf32>
    %21 = arith.maximumf %18, %20 : vector<16x1xf32>
    %22 = arith.subf %18, %21 : vector<16x1xf32>
    %23 = math.exp %22 : vector<16x1xf32>
    %c0_15 = arith.constant 0 : index
    %c0_16 = arith.constant 0 : index
    %24 = vector.load %arg10[%c0_15, %c0_16] : memref<16x1xf32, #tpu.memory_space<vmem>>, vector<16x1xf32>
    %25 = arith.mulf %23, %24 : vector<16x1xf32>
    %26 = vector.broadcast %21 : vector<16x1xf32> to vector<16x128xf32>
    %27 = arith.subf %9, %26 : vector<16x128xf32>
    %28 = math.exp %27 : vector<16x128xf32>
    %cst_17 = arith.constant dense<0.000000e+00> : vector<16xf32>
    %29 = vector.multi_reduction <add>, %28, %cst_17 [1] : vector<16x128xf32> to vector<16xf32>
    %30 = vector.shape_cast %29 : vector<16xf32> to vector<16x1xf32>
    %31 = arith.addf %25, %30 : vector<16x1xf32>
    %c0_18 = arith.constant 0 : index
    %c0_19 = arith.constant 0 : index
    %32 = vector.load %arg10[%c0_18, %c0_19] : memref<16x1xf32, #tpu.memory_space<vmem>>, vector<16x1xf32>
    tpu.vector_store %arg10[%c0_18, %c0_19], %31 {strides = array<i32>} : memref<16x1xf32, #tpu.memory_space<vmem>>, vector<16x1xf32>,
    %c0_20 = arith.constant 0 : index
    %c0_21 = arith.constant 0 : index
    %33 = vector.load %arg9[%c0_20, %c0_21] : memref<16x1xf32, #tpu.memory_space<vmem>>, vector<16x1xf32>
    tpu.vector_store %arg9[%c0_20, %c0_21], %21 {strides = array<i32>} : memref<16x1xf32, #tpu.memory_space<vmem>>, vector<16x1xf32>,
    %c1_i32 = arith.constant 1 : i32
    %34 = arith.cmpi eq, %arg1, %c1_i32 : i32
    %35 = arith.extui %34 : i1 to i32
    %c0_i32_22 = arith.constant 0 : i32
    %36 = arith.cmpi ne, %35, %c0_i32_22 : i32
    scf.if %36 {
      %c0_23 = arith.constant 0 : index
      %c0_24 = arith.constant 0 : index
      %37 = vector.load %arg9[%c0_23, %c0_24] : memref<16x1xf32, #tpu.memory_space<vmem>>, vector<16x1xf32>
      %c0_25 = arith.constant 0 : index
      %c0_26 = arith.constant 0 : index
      %38 = vector.load %arg10[%c0_25, %c0_26] : memref<16x1xf32, #tpu.memory_space<vmem>>, vector<16x1xf32>
      %39 = math.log %38 : vector<16x1xf32>
      %40 = arith.addf %37, %39 : vector<16x1xf32>
      %c0_27 = arith.constant 0 : index
      %c0_28 = arith.constant 0 : index
      %41 = vector.load %arg11[%c0_27, %c0_28] : memref<16x33xf32, #tpu.memory_space<vmem>>, vector<16x33xf32>
      %42 = vector.extract_strided_slice %41 {offsets = [0, 0], sizes = [16, 32], strides = [1, 1]} : vector<16x33xf32> to vector<16x32xf32>
      %43 = arith.mulf %2, %42 : vector<16x32xf32>
      %cst_29 = arith.constant dense<0.000000e+00> : vector<16xf32>
      %44 = vector.multi_reduction <add>, %43, %cst_29 [1] : vector<16x32xf32> to vector<16xf32>
      %45 = vector.shape_cast %44 : vector<16xf32> to vector<16x1xf32>
      %46 = vector.extract_strided_slice %41 {offsets = [0, 32], sizes = [16, 1], strides = [1, 1]} : vector<16x33xf32> to vector<16x1xf32>
      %47 = arith.mulf %46, %40 : vector<16x1xf32>
      %48 = arith.subf %47, %45 : vector<16x1xf32>
      %49 = vector.shape_cast %48 : vector<16x1xf32> to vector<1x16x1xf32>
      %cst_30 = arith.constant dense<0.000000e+00> : vector<1xf32>
      %50 = vector.multi_reduction <add>, %49, %cst_30 [1, 2] : vector<1x16x1xf32> to vector<1xf32>
      %51 = vector.shape_cast %50 : vector<1xf32> to vector<1x1x1xf32>
      %52 = vector.extract %51[0, 0, 0] : f32 from vector<1x1x1xf32>
      %53 = vector.broadcast %52 : f32 to vector<1x1x1xf32>
      %c0_31 = arith.constant 0 : index
      %c0_32 = arith.constant 0 : index
      %c0_33 = arith.constant 0 : index
      %54 = vector.load %arg6[%c0_31, %c0_32, %c0_33] : memref<1x1x1xf32, #tpu.memory_space<vmem>>, vector<1x1x1xf32>
      tpu.vector_store %arg6[%c0_31, %c0_32, %c0_33], %53 {strides = array<i32>} : memref<1x1x1xf32, #tpu.memory_space<vmem>>, vector<1x1x1xf32>,
      %cst_34 = arith.constant dense<0.000000e+00> : vector<32xf32>
      %55 = vector.multi_reduction <add>, %0, %cst_34 [0] : vector<16x32xf32> to vector<32xf32>
      %56 = vector.shape_cast %55 : vector<32xf32> to vector<1x1x32xf32>
      %c0_35 = arith.constant 0 : index
      %c0_36 = arith.constant 0 : index
      %c0_37 = arith.constant 0 : index
      %57 = vector.load %arg7[%c0_35, %c0_36, %c0_37] : memref<1x1x32xf32, #tpu.memory_space<vmem>>, vector<1x1x32xf32>
      tpu.vector_store %arg7[%c0_35, %c0_36, %c0_37], %56 {strides = array<i32>} : memref<1x1x32xf32, #tpu.memory_space<vmem>>, vector<1x1x32xf32>,
      %58 = arith.mulf %0, %0 : vector<16x32xf32>
      %59 = vector.shape_cast %58 : vector<16x32xf32> to vector<1x16x32xf32>
      %cst_38 = arith.constant dense<0.000000e+00> : vector<1xf32>
      %60 = vector.multi_reduction <add>, %59, %cst_38 [1, 2] : vector<1x16x32xf32> to vector<1xf32>
      %61 = vector.shape_cast %60 : vector<1xf32> to vector<1x1x1xf32>
      %62 = vector.extract %61[0, 0, 0] : f32 from vector<1x1x1xf32>
      %63 = vector.broadcast %62 : f32 to vector<1x1x1xf32>
      %c0_39 = arith.constant 0 : index
      %c0_40 = arith.constant 0 : index
      %c0_41 = arith.constant 0 : index
      %64 = vector.load %arg8[%c0_39, %c0_40, %c0_41] : memref<1x1x1xf32, #tpu.memory_space<vmem>>, vector<1x1x1xf32>
      tpu.vector_store %arg8[%c0_39, %c0_40, %c0_41], %63 {strides = array<i32>} : memref<1x1x1xf32, #tpu.memory_space<vmem>>, vector<1x1x1xf32>,
    } else {
    }
    return
  }
  func.func @transform_0(%arg0: i32, %arg1: i32) -> (i32, i32) {
    %c0_i32 = arith.constant 0 : i32
    %c0_i32_0 = arith.constant 0 : i32
    return %arg0, %c0_i32 : i32, i32
  }
  func.func @transform_1(%arg0: i32, %arg1: i32) -> (i32, i32) {
    %c0_i32 = arith.constant 0 : i32
    %c0_i32_0 = arith.constant 0 : i32
    %c0_i32_1 = arith.constant 0 : i32
    return %c0_i32, %c0_i32_0 : i32, i32
  }
  func.func @transform_2(%arg0: i32, %arg1: i32) -> (i32, i32) {
    %c0_i32 = arith.constant 0 : i32
    %c0_i32_0 = arith.constant 0 : i32
    %c0_i32_1 = arith.constant 0 : i32
    return %c0_i32, %c0_i32_0 : i32, i32
  }
  func.func @transform_3(%arg0: i32, %arg1: i32) -> (i32, i32) {
    %c0_i32 = arith.constant 0 : i32
    return %arg0, %arg1 : i32, i32
  }
  func.func @transform_4(%arg0: i32, %arg1: i32) -> (i32, i32, i32) {
    %c0_i32 = arith.constant 0 : i32
    %c0_i32_0 = arith.constant 0 : i32
    %c0_i32_1 = arith.constant 0 : i32
    return %arg0, %c0_i32, %c0_i32_0 : i32, i32, i32
  }
  func.func @transform_5(%arg0: i32, %arg1: i32) -> (i32, i32, i32) {
    %c0_i32 = arith.constant 0 : i32
    %c0_i32_0 = arith.constant 0 : i32
    %c0_i32_1 = arith.constant 0 : i32
    return %arg0, %c0_i32, %c0_i32_0 : i32, i32, i32
  }
  func.func @transform_6(%arg0: i32, %arg1: i32) -> (i32, i32, i32) {
    %c0_i32 = arith.constant 0 : i32
    %c0_i32_0 = arith.constant 0 : i32
    %c0_i32_1 = arith.constant 0 : i32
    return %arg0, %c0_i32, %c0_i32_0 : i32, i32, i32
  }
}

</mosaic_0001>

<llo_original>
// kernel: tpu_custom_call.1
$region0: #{tpu_custom_call.1}
  #allocation0 [shape = 'u32[]', space=smem, size = 0x4, offset = 0x4, fixed_abs, tag = 'smem constant byte address 0x4 - core index']
  #allocation1 [shape = 'u32[144,128]{1,0:T(1,128)}', space=vmem, size = 0x12000, scoped, tag = 'internal scratch']
  #allocation2 [shape = 'f32[16,1]{1,0:T(8,128)}', space=vmem, size = 0x2000, scoped, tag = 'scratch operand']
  #allocation3 [shape = 'f32[16,1]{1,0:T(8,128)}', space=vmem, size = 0x2000, scoped, tag = 'scratch operand']
  #allocation4 [shape = 'f32[16,33]{1,0:T(8,128)}', space=vmem, size = 0x2000, scoped, tag = 'scratch operand']
  %s0 = inlined_call_operand.vmem [shape: f32[32,32], index: 0, kind: input, shape index: {}]
  %s1 = inlined_call_operand.vmem [shape: f32[32,256], index: 1, kind: input, shape index: {}]
  %s2 = inlined_call_operand.vmem [shape: f32[256,33], index: 2, kind: input, shape index: {}]
  %s3 = inlined_call_operand.vmem [shape: f32[32,256], index: 3, kind: input, shape index: {}]
  %s4 = inlined_call_operand.vmem [shape: f32[2,1,1], index: 4, kind: output, shape index: {0}]
  %s5 = inlined_call_operand.hbm [shape: f32[2,1,32], index: 5, kind: output, shape index: {1}]
  %s6 = inlined_call_operand.vmem [shape: f32[2,1,1], index: 6, kind: output, shape index: {2}]
  %7 = xla_tuple %s4, %s5, %s6
  %s8 = sld [smem:[#allocation0]]
  $region111: #{tpu_custom_call.1} parent=0
    _
  %s10 = ssub.s32 1, %s8
  %s11 = scalar_select 0, %s10, %s8
  $region1: #{tpu_custom_call.1} parent=0
    #allocation5 [shape = 'u8[16384]{0}', space=vmem, size = 0x4000, scoped, tag = 'input window, operand 3']
    #allocation6 [shape = 'u8[1024]{0}', space=vmem, size = 0x400, scoped, tag = 'output window, operand 1']
    #allocation7 [shape = 's32[2]{0}', space=sflag, size = 0x8, scoped, tag = 'scoped memory for tpu_custom_call.1']
    %12 = vsyncpa [#allocation7], 0
    %s13 = scalar_lea.sflag [#allocation7], 1
    %14 = vsyncpa %s13, 0
    loop: start=0, step=1, limit=6
    $region2: #{tpu_custom_call.1} parent=1 // loop_pre_header
      _
    $region3: #{tpu_custom_call.1} parent=1 // loop_header
      %s16 = sphi 0, %s20
      %p17 = scmp.ge.s32.totalorder %s16, 6
      %s23 = sphi 0, %s35
      %s24 = sphi 0, %s31
      %s25 = sphi 0, %s23
      %s26 = sphi 0, %s24
      %s27 = sphi 0, %s25
      %s28 = sphi 0, %s26
      %s38 = sphi 0, %s40
      %s41 = sphi 0, %s38
      %s42 = sphi 0, %s41
      %s58 = sphi 0, %s42
      %s62 = sphi 0, %s62
      %s64 = sphi 0, %s62
      %s65 = sphi 0, %s64
      %s79 = sphi 0, %s65
      %s83 = sphi 0, %s83
      %s85 = sphi 0, %s83
      %s86 = sphi 0, %s85
      %s100 = sphi 0, %s86
      %s108 = sphi 0, %s110
      %s111 = sphi 0, %s108
      %s112 = sphi 0, %s111
      %s128 = sphi 0, %s112
      %s134 = sphi 0, %s136
      %s137 = sphi 0, %s134
      %s138 = sphi 0, %s137
      %s154 = sphi 0, %s138
      %s160 = sphi 0, %s162
      %s163 = sphi 0, %s160
      %s164 = sphi 0, %s163
      %s180 = sphi 0, %s164
      %s186 = sphi 0, %s188
      %s189 = sphi 0, %s186
      %s190 = sphi 0, %s189
      %s206 = sphi 0, %s190
    $region4: #{tpu_custom_call.1} parent=1 // loop_header_branch
      %19 = sbr.rel (%p17) target = $region8
    $region5: #{tpu_custom_call.1} parent=1 // loop_body
      %s21 = ssub.s32 %s16, 1
      %s22 = ssub.s32 %s16, 2
      %s29 = sadd.s32 1, %s24
      %p30 = scmp.ge.s32.totalorder %s29, 2
      %s31 = scalar_select %p30, 0, %s29
      %s32 = sadd.s32 1, %s23
      %s33 = scalar_select %p30, %s32, %s23
      %p34 = scmp.ge.s32.totalorder %s33, 2
      %s35 = scalar_select %p34, 0, %s33
      %s36 = ssub.s32 %s23, %s35
      %p37 = scmp.eq.s32.totalorder %s36, 0
      %s39 = sadd.s32 %s38, 1
      %s40 = scalar_select %p37, %s38, %s39
      %p43 = pneg %p37
      %p44 = scmp.eq.s32.totalorder %s16, 3
      %p45 = por %p43, %p44
      %p46 = scmp.ne.s32.totalorder %s38, %s41
      %p47 = scmp.eq.s32.totalorder %s16, 0
      %p48 = por %p46, %p47
      %p49 = scmp.ne.s32.totalorder %s38, %s41
      %p50 = scmp.eq.s32.totalorder %s21, 3
      %p51 = por %p49, %p50
      %p52 = scmp.ne.s32.totalorder %s41, %s42
      %p53 = scmp.eq.s32.totalorder %s21, 0
      %p54 = por %p52, %p53
      %p55 = scmp.ne.s32.totalorder %s41, %s42
      %p56 = scmp.eq.s32.totalorder %s22, 3
      %p57 = por %p55, %p56
      %p59 = scmp.ne.s32.totalorder %s42, %s58
      %p60 = scmp.eq.s32.totalorder %s22, 0
      %p61 = por %p59, %p60
      %s63 = sadd.s32 %s62, 1
      %p66 = scmp.eq.s32.totalorder %s16, 3
      %p67 = scmp.ne.s32.totalorder %s62, %s64
      %p68 = scmp.eq.s32.totalorder %s16, 0
      %p69 = por %p67, %p68
      %p70 = scmp.ne.s32.totalorder %s62, %s64
      %p71 = scmp.eq.s32.totalorder %s21, 3
      %p72 = por %p70, %p71
      %p73 = scmp.ne.s32.totalorder %s64, %s65
      %p74 = scmp.eq.s32.totalorder %s21, 0
      %p75 = por %p73, %p74
      %p76 = scmp.ne.s32.totalorder %s64, %s65
      %p77 = scmp.eq.s32.totalorder %s22, 3
      %p78 = por %p76, %p77
      %p80 = scmp.ne.s32.totalorder %s65, %s79
      %p81 = scmp.eq.s32.totalorder %s22, 0
      %p82 = por %p80, %p81
      %s84 = sadd.s32 %s83, 1
      %p87 = scmp.eq.s32.totalorder %s16, 3
      %p88 = scmp.ne.s32.totalorder %s83, %s85
      %p89 = scmp.eq.s32.totalorder %s16, 0
      %p90 = por %p88, %p89
      %p91 = scmp.ne.s32.totalorder %s83, %s85
      %p92 = scmp.eq.s32.totalorder %s21, 3
      %p93 = por %p91, %p92
      %p94 = scmp.ne.s32.totalorder %s85, %s86
      %p95 = scmp.eq.s32.totalorder %s21, 0
      %p96 = por %p94, %p95
      %p97 = scmp.ne.s32.totalorder %s85, %s86
      %p98 = scmp.eq.s32.totalorder %s22, 3
      %p99 = por %p97, %p98
      %p101 = scmp.ne.s32.totalorder %s86, %s100
      %p102 = scmp.eq.s32.totalorder %s22, 0
      %p103 = por %p101, %p102
      %s104 = ssub.s32 %s23, %s35
      %s105 = ssub.s32 %s24, %s31
      %s106 = sor.u32 %s104, %s105
      %p107 = scmp.eq.s32.totalorder %s106, 0
      %s109 = sadd.s32 %s108, 1
      %s110 = scalar_select %p107, %s108, %s109
      %p113 = pneg %p107
      %p114 = scmp.eq.s32.totalorder %s16, 3
      %p115 = por %p113, %p114
      %p116 = scmp.ne.s32.totalorder %s108, %s111
      %p117 = scmp.eq.s32.totalorder %s16, 0
      %p118 = por %p116, %p117
      %p119 = scmp.ne.s32.totalorder %s108, %s111
      %p120 = scmp.eq.s32.totalorder %s21, 3
      %p121 = por %p119, %p120
      %p122 = scmp.ne.s32.totalorder %s111, %s112
      %p123 = scmp.eq.s32.totalorder %s21, 0
      %p124 = por %p122, %p123
      %p125 = scmp.ne.s32.totalorder %s111, %s112
      %p126 = scmp.eq.s32.totalorder %s22, 3
      %p127 = por %p125, %p126
      %p129 = scmp.ne.s32.totalorder %s112, %s128
      %p130 = scmp.eq.s32.totalorder %s22, 0
      %p131 = por %p129, %p130
      %s132 = ssub.s32 %s23, %s35
      %p133 = scmp.eq.s32.totalorder %s132, 0
      %s135 = sadd.s32 %s134, 1
      %s136 = scalar_select %p133, %s134, %s135
      %p139 = pneg %p133
      %p140 = scmp.eq.s32.totalorder %s16, 3
      %p141 = por %p139, %p140
      %p142 = scmp.ne.s32.totalorder %s134, %s137
      %p143 = scmp.eq.s32.totalorder %s16, 0
      %p144 = por %p142, %p143
      %p145 = scmp.ne.s32.totalorder %s134, %s137
      %p146 = scmp.eq.s32.totalorder %s21, 3
      %p147 = por %p145, %p146
      %p148 = scmp.ne.s32.totalorder %s137, %s138
      %p149 = scmp.eq.s32.totalorder %s21, 0
      %p150 = por %p148, %p149
      %p151 = scmp.ne.s32.totalorder %s137, %s138
      %p152 = scmp.eq.s32.totalorder %s22, 3
      %p153 = por %p151, %p152
      %p155 = scmp.ne.s32.totalorder %s138, %s154
      %p156 = scmp.eq.s32.totalorder %s22, 0
      %p157 = por %p155, %p156
      %s158 = ssub.s32 %s23, %s35
      %p159 = scmp.eq.s32.totalorder %s158, 0
      %s161 = sadd.s32 %s160, 1
      %s162 = scalar_select %p159, %s160, %s161
      %p165 = pneg %p159
      %p166 = scmp.eq.s32.totalorder %s16, 3
      %p167 = por %p165, %p166
      %p168 = scmp.ne.s32.totalorder %s160, %s163
      %p169 = scmp.eq.s32.totalorder %s16, 0
      %p170 = por %p168, %p169
      %p171 = scmp.ne.s32.totalorder %s160, %s163
      %p172 = scmp.eq.s32.totalorder %s21, 3
      %p173 = por %p171, %p172
      %p174 = scmp.ne.s32.totalorder %s163, %s164
      %p175 = scmp.eq.s32.totalorder %s21, 0
      %p176 = por %p174, %p175
      %p177 = scmp.ne.s32.totalorder %s163, %s164
      %p178 = scmp.eq.s32.totalorder %s22, 3
      %p179 = por %p177, %p178
      %p181 = scmp.ne.s32.totalorder %s164, %s180
      %p182 = scmp.eq.s32.totalorder %s22, 0
      %p183 = por %p181, %p182
      %s184 = ssub.s32 %s23, %s35
      %p185 = scmp.eq.s32.totalorder %s184, 0
      %s187 = sadd.s32 %s186, 1
      %s188 = scalar_select %p185, %s186, %s187
      %p191 = pneg %p185
      %p192 = scmp.eq.s32.totalorder %s16, 3
      %p193 = por %p191, %p192
      %p194 = scmp.ne.s32.totalorder %s186, %s189
      %p195 = scmp.eq.s32.totalorder %s16, 0
      %p196 = por %p194, %p195
      %p197 = scmp.ne.s32.totalorder %s186, %s189
      %p198 = scmp.eq.s32.totalorder %s21, 3
      %p199 = por %p197, %p198
      %p200 = scmp.ne.s32.totalorder %s189, %s190
      %p201 = scmp.eq.s32.totalorder %s21, 0
      %p202 = por %p200, %p201
      %p203 = scmp.ne.s32.totalorder %s189, %s190
      %p204 = scmp.eq.s32.totalorder %s22, 3
      %p205 = por %p203, %p204
      %p207 = scmp.ne.s32.totalorder %s190, %s206
      %p208 = scmp.eq.s32.totalorder %s22, 0
      %p209 = por %p207, %p208
      %p210 = scmp.le.s32.totalorder 1, %s16
      %p211 = scmp.lt.s32.totalorder %s16, 5
      %p212 = pnand %p210, %p211
      %p213 = pneg %p212
      // Predicated region
      $region9: #{tpu_custom_call.1} parent=5 // pred_check
        _
      $region10: #{tpu_custom_call.1} parent=5 // pred_check_branch
        %215 = sbr.rel (%p212) target = $region12
      $region11: #{tpu_custom_call.1} parent=5 // pred_region
        %s216 = ssub.s32 %s16, 1
        // Predicated region
        $region13: #{tpu_custom_call.1} parent=11 // pred_check
          %p217 = pneg %p75
        $region14: #{tpu_custom_call.1} parent=11 // pred_check_branch
          %219 = sbr.rel (%p217) target = $region16
        $region15: #{tpu_custom_call.1} parent=11 // pred_region
          _
        $region16: #{tpu_custom_call.1} parent=11 // pred_fallthru
          _
        // Predicated region
        $region17: #{tpu_custom_call.1} parent=11 // pred_check
          %p220 = pneg %p96
        $region18: #{tpu_custom_call.1} parent=11 // pred_check_branch
          %222 = sbr.rel (%p220) target = $region20
        $region19: #{tpu_custom_call.1} parent=11 // pred_region
          _
        $region20: #{tpu_custom_call.1} parent=11 // pred_fallthru
          _
      $region12: #{tpu_custom_call.1} parent=5 // pred_fallthru
        _
      %p223 = scmp.lt.s32.totalorder %s16, 4
      // Predicated region
      $region21: #{tpu_custom_call.1} parent=5 // pred_check
        %p224 = pneg %p223
      $region22: #{tpu_custom_call.1} parent=5 // pred_check_branch
        %226 = sbr.rel (%p224) target = $region24
      $region23: #{tpu_custom_call.1} parent=5 // pred_region
        // Predicated region
        $region25: #{tpu_custom_call.1} parent=23 // pred_check
          %p227 = pneg %p48
        $region26: #{tpu_custom_call.1} parent=23 // pred_check_branch
          %229 = sbr.rel (%p227) target = $region28
        $region27: #{tpu_custom_call.1} parent=23 // pred_region
          %s230 = smul.u32 2, %s23
          %p231 = scmp.lt.s32.totalorder %s230, 3
          %s232 = scalar_select %p231, %s230, 3
          %s233 = smul.addr %s232, 8
          %s234 = scalar_lea.vmem %s0, %s233
          %s235 = smul.u32 2, %s23
        $region28: #{tpu_custom_call.1} parent=23 // pred_fallthru
          _
        // Predicated region
        $region29: #{tpu_custom_call.1} parent=23 // pred_check
          %p236 = pneg %p118
        $region30: #{tpu_custom_call.1} parent=23 // pred_check_branch
          %238 = sbr.rel (%p236) target = $region32
        $region31: #{tpu_custom_call.1} parent=23 // pred_region
          %s239 = sand.u32 %s108, 1
          %s240 = sand.u32 %s108, 1
          %s241 = smul.addr %s240, 16
          %s242 = scalar_lea.vmem [#allocation5], %s241
          %s243 = smul.u32 2, %s23
          %s244 = smul.addr %s243, 2
          %s245 = sadd.s32 %s24, %s244
          %s246 = smul.addr %s245, 8
          %s247 = scalar_lea.vmem %s3, %s246
          // Predicated region
          $region33: #{tpu_custom_call.1} parent=31 // pred_check
            _
          $region34: #{tpu_custom_call.1} parent=31 // pred_check_branch
            %249 = sbr.rel (0) target = $region36
          $region35: #{tpu_custom_call.1} parent=31 // pred_region
            // Predicated region
            $region37: #{tpu_custom_call.1} parent=35 // pred_check
              _
            $region38: #{tpu_custom_call.1} parent=35 // pred_check_branch
              %251 = sbr.rel (0) target = $region40
            $region39: #{tpu_custom_call.1} parent=35 // pred_region
              // Predicated region
              $region52: #{tpu_custom_call.1} parent=39 // pred_check
                _
              $region53: #{tpu_custom_call.1} parent=39 // pred_check_branch
                %268 = sbr.rel (0) target = $region55
              $region54: #{tpu_custom_call.1} parent=39 // pred_region
                loop: start=0, step=1, limit=1
                $region56: #{tpu_custom_call.1} parent=54 // loop_pre_header
                  _
                $region57: #{tpu_custom_call.1} parent=54 // loop_header
                  %s270 = sphi 0, %s274
                  %p271 = scmp.ge.s32.totalorder %s270, 1
                  %s275 = sphi %s247, %s247
                  %s276 = sphi %s242, %s242
                $region58: #{tpu_custom_call.1} parent=54 // loop_header_branch
                  %273 = sbr.rel (%p271) target = $region62
                $region59: #{tpu_custom_call.1} parent=54 // loop_body
                  %v277 = vld [vmem:[%s275] sm:$0xff]
                  %278 = vst [vmem:[%s276] sm:$0xff] %v277
                  %v279 = vld [vmem:[%s275 + $0x10] sm:$0xff]
                  %280 = vst [vmem:[%s276 + $0x8] sm:$0xff] %v279
                $region60: #{tpu_custom_call.1} parent=54 // loop_footer
                  %s274 = sadd.s32 1, %s270
                $region61: #{tpu_custom_call.1} parent=54 // loop_footer_branch
                  %269 = sbr.rel target = $region57
                $region62: #{tpu_custom_call.1} parent=54 // loop_exit
                  _
              $region55: #{tpu_custom_call.1} parent=39 // pred_fallthru
                _
              // Predicated region
              $region63: #{tpu_custom_call.1} parent=39 // pred_check
                _
              $region64: #{tpu_custom_call.1} parent=39 // pred_check_branch
                %282 = sbr.rel target = $region66
              $region65: #{tpu_custom_call.1} parent=39 // pred_region
                _
              $region66: #{tpu_custom_call.1} parent=39 // pred_fallthru
                _
            $region40: #{tpu_custom_call.1} parent=35 // pred_fallthru
              _
            // Predicated region
            $region41: #{tpu_custom_call.1} parent=35 // pred_check
              _
            $region42: #{tpu_custom_call.1} parent=35 // pred_check_branch
              %253 = sbr.rel target = $region44
            $region43: #{tpu_custom_call.1} parent=35 // pred_region
              loop: start=0, step=1, limit=1
              $region45: #{tpu_custom_call.1} parent=43 // loop_pre_header
                _
              $region46: #{tpu_custom_call.1} parent=43 // loop_header
                %s256 = sphi 0, %s260
                %p257 = scmp.ge.s32.totalorder %s256, 1
                %s261 = sphi %s247, %s247
                %s262 = sphi %s242, %s242
              $region47: #{tpu_custom_call.1} parent=43 // loop_header_branch
                %259 = sbr.rel (%p257) target = $region51
              $region48: #{tpu_custom_call.1} parent=43 // loop_body
                %v263 = vld [vmem:[%s261] sm:$0xff]
                %264 = vst [vmem:[%s262] sm:$0xff] %v263
                %v265 = vld [vmem:[%s261 + $0x10] sm:$0xff]
                %266 = vst [vmem:[%s262 + $0x8] sm:$0xff] %v265
              $region49: #{tpu_custom_call.1} parent=43 // loop_footer
                %s260 = sadd.s32 1, %s256
              $region50: #{tpu_custom_call.1} parent=43 // loop_footer_branch
                %255 = sbr.rel target = $region46
              $region51: #{tpu_custom_call.1} parent=43 // loop_exit
                _
            $region44: #{tpu_custom_call.1} parent=35 // pred_fallthru
              _
          $region36: #{tpu_custom_call.1} parent=31 // pred_fallthru
            _
          %283 = vnop
        $region32: #{tpu_custom_call.1} parent=23 // pred_fallthru
          _
      $region24: #{tpu_custom_call.1} parent=5 // pred_fallthru
        _
      %p284 = scmp.le.s32.totalorder 1, %s16
      %p285 = scmp.lt.s32.totalorder %s16, 5
      %p286 = pnand %p284, %p285
      %p287 = pneg %p286
      // Predicated region
      $region67: #{tpu_custom_call.1} parent=5 // pred_check
        _
      $region68: #{tpu_custom_call.1} parent=5 // pred_check_branch
        %289 = sbr.rel (%p286) target = $region70
      $region69: #{tpu_custom_call.1} parent=5 // pred_region
        %s290 = ssub.s32 %s16, 1
        %s291 = sand.u32 %s111, 1
        %s292 = sand.u32 %s111, 1
        %s293 = smul.addr %s292, 16
        %s294 = scalar_lea.vmem [#allocation5], %s293
        // Predicated region
        $region71: #{tpu_custom_call.1} parent=69 // pred_check
          %p295 = pneg %p124
        $region72: #{tpu_custom_call.1} parent=69 // pred_check_branch
          %297 = sbr.rel (%p295) target = $region74
        $region73: #{tpu_custom_call.1} parent=69 // pred_region
          _
        $region74: #{tpu_custom_call.1} parent=69 // pred_fallthru
          _
        %s298 = smul.u32 2, %s25
        %p299 = scmp.lt.s32.totalorder %s298, 3
        %s300 = scalar_select %p299, %s298, 3
        %s301 = smul.addr %s300, 8
        %s302 = scalar_lea.vmem %s0, %s301
        %p303 = pneg %p54
        %p304 = pneg %p51
        %p305 = pneg %p75
        %p306 = pneg %p72
        %p307 = pneg %p96
        %p308 = pneg %p93
        %s309 = sand.u32 %s111, 1
        %s310 = sand.u32 %s111, 1
        %s311 = smul.addr %s310, 16
        %s312 = scalar_lea.vmem [#allocation5], %s311
        %p313 = pneg %p124
        %p314 = pneg %p121
        %p315 = pneg %p150
        %p316 = pneg %p147
        %p317 = scmp.lt.s32.totalorder %s25, 1
        %s318 = scalar_select %p317, %s25, 1
        %s319 = scalar_lea.vmem %s4, %s318
        %p320 = pneg %p176
        %p321 = pneg %p173
        %s322 = sand.u32 %s163, 1
        %s323 = scalar_lea.sflag [#allocation7], %s322
        %s324 = sand.u32 %s163, 1
        %s325 = scalar_lea.vmem [#allocation6], %s324
        %p326 = pneg %p202
        %p327 = pneg %p199
        %p328 = scmp.lt.s32.totalorder %s25, 1
        %s329 = scalar_select %p328, %s25, 1
        %s330 = scalar_lea.vmem %s6, %s329
        %s331 = smul.u32 2, %s25
        %p332 = scmp.lt.s32.totalorder %s331, 3
        %s333 = scalar_select %p332, %s331, 3
        %s334 = smul.addr %s333, 8
        %s335 = scalar_lea.vmem %s0, %s334
        %s336 = smul.u32 2, %s25
        %s337 = smul.u32 2, %s25
        %p338 = scmp.lt.s32.totalorder %s25, 1
        %s339 = scalar_select %p338, %s25, 1
        %s340 = scalar_lea.vmem %s4, %s339
        %p341 = scmp.lt.s32.totalorder %s25, 1
        %s342 = scalar_select %p341, %s25, 1
        %s343 = scalar_lea.vmem %s6, %s342
        %v344 = vld [vmem:[%s335] sm:$0xff]
        %v345 = vld [vmem:[%s335 + $0x8] sm:$0xff]
        %v346 = vmul.f32 %v344, 0.104166664
        %v347 = vmul.f32 %v345, 0.104166664
        %s348 = smul.u32 %s26, 128
        %s349 = sshra.s32 %s348, 7
        %s350 = sand.u32 %s348, 127
        %s351 = smul.addr %s349, 8
        %s352 = scalar_lea.vmem %s1, %s351
        %v353 = vld [vmem:[%s352] sm:$0xff]
        %v354 = vld [vmem:[%s352 + $0x10] sm:$0xff]
        %v355 = vld [vmem:[%s352 + $0x20] sm:$0xff]
        %v356 = vld [vmem:[%s352 + $0x30] sm:$0xff]
        %s357 = scalar_lea.vmem %s2, %s348
        %v358 = vld [vmem:[%s357] sm:$0xff]
        %v359 = vld [vmem:[%s357 + $0x8] sm:$0xff]
        %v360 = vld [vmem:[%s357 + $0x10] sm:$0xff]
        %v361 = vld [vmem:[%s357 + $0x18] sm:$0xff]
        %v362 = vld [vmem:[%s357 + $0x20] sm:$0xff]
        %v363 = vld [vmem:[%s357 + $0x28] sm:$0xff]
        %v364 = vld [vmem:[%s357 + $0x30] sm:$0xff]
        %v365 = vld [vmem:[%s357 + $0x38] sm:$0xff]
        %v366 = vld [vmem:[%s357 + $0x40] sm:$0xff]
        %v367 = vld [vmem:[%s357 + $0x48] sm:$0xff]
        %v368 = vld [vmem:[%s357 + $0x50] sm:$0xff]
        %v369 = vld [vmem:[%s357 + $0x58] sm:$0xff]
        %v370 = vld [vmem:[%s357 + $0x60] sm:$0xff]
        %v371 = vld [vmem:[%s357 + $0x68] sm:$0xff]
        %v372 = vld [vmem:[%s357 + $0x70] sm:$0xff]
        %v373 = vld [vmem:[%s357 + $0x78] sm:$0xff]
        %vm374 = vcmask 261120
        %v376 = vsel %vm374, %v346, 0
        %v379 = vsel %vm374, %v347, 0
        %381 = vmatprep.subr.mxu0 0.0
        %382 = vmatpush1.msra.mxu0 %v353
        %383 = vmatprep.subr.mxu0 0.0
        %384 = vmatpush1.msra.mxu0 %v354
        %385 = vmatprep.subr.mxu0 0.0
        %386 = vmatpush1.msra.mxu0 %v355
        %387 = vmatprep.subr.mxu0 0.0
        %388 = vmatpush1.msra.mxu0 %v356
        %389 = vmatprep.subr.mxu0 0.0
        %390 = vmatpush1.msra.mxu0 0.0
        %391 = vmatprep.subr.mxu0 0.0
        %392 = vmatpush1.msra.mxu0 0.0
        %393 = vmatprep.subr.mxu0 0.0
        %394 = vmatpush1.msra.mxu0 0.0
        %395 = vmatprep.subr.mxu0 0.0
        %396 = vmatpush1.msra.mxu0 0.0
        %397 = vmatprep.subr.mxu0 0.0
        %398 = vmatpush1.msra.mxu0 0.0
        %399 = vmatprep.subr.mxu0 0.0
        %400 = vmatpush1.msra.mxu0 0.0
        %401 = vmatprep.subr.mxu0 0.0
        %402 = vmatpush1.msra.mxu0 0.0
        %403 = vmatprep.subr.mxu0 0.0
        %404 = vmatpush1.msra.mxu0 0.0
        %405 = vmatprep.subr.mxu0 0.0
        %406 = vmatpush1.msra.mxu0 0.0
        %407 = vmatprep.subr.mxu0 0.0
        %408 = vmatpush1.msra.mxu0 0.0
        %409 = vmatprep.subr.mxu0 0.0
        %410 = vmatpush1.msra.mxu0 0.0
        %411 = vmatprep.subr.mxu0 0.0
        %412 = vmatpush1.msra.mxu0 0.0
        %413 = vmatprep.subr.mxu0 0.0
        %414 = vmatpush1.msra.mxu0 0.0
        %415 = vmatprep.subr.mxu0 0.0
        %416 = vmatpush1.msra.mxu0 0.0
        %417 = vmatprep.subr.mxu0 0.0
        %418 = vmatpush1.msra.mxu0 0.0
        %419 = vmatprep.subr.mxu0 0.0
        %420 = vmatpush1.msra.mxu0 0.0
        %421 = vmatprep.subr.mxu0 0.0
        %422 = vmatpush1.msra.mxu0 0.0
        %423 = vmatprep.subr.mxu0 0.0
        %424 = vmatpush1.msra.mxu0 0.0
        %425 = vmatprep.subr.mxu0 0.0
        %426 = vmatpush1.msra.mxu0 0.0
        %427 = vmatprep.subr.mxu0 0.0
        %428 = vmatpush1.msra.mxu0 0.0
        %429 = vmatprep.subr.mxu0 0.0
        %430 = vmatpush1.msra.mxu0 0.0
        %431 = vmatprep.subr.mxu0 0.0
        %432 = vmatpush1.msra.mxu0 0.0
        %433 = vmatprep.subr.mxu0 0.0
        %434 = vmatpush1.msra.mxu0 0.0
        %435 = vmatprep.subr.mxu0 0.0
        %436 = vmatpush1.msra.mxu0 0.0
        %437 = vmatprep.subr.mxu0 0.0
        %438 = vmatpush1.msra.mxu0 0.0
        %439 = vmatprep.subr.mxu0 0.0
        %440 = vmatpush1.msra.mxu0 0.0
        %441 = vmatprep.subr.mxu0 0.0
        %442 = vmatpush1.msra.mxu0 0.0
        %443 = vmatprep.subr.mxu0 0.0
        %444 = vmatpush1.msra.mxu0 0.0
        %445 = vmatprep.mubr.f32.mxu0 0.0
        %446 = vmatmul.mubr.f32.gmra.mrb[0].mxu0 %v376
        %v447 = vpop.f32.mrb[0].mxu0
        %v448 = vadd.f32 0.0, %v447
        %v449 = vpop.f32.mrb[0].mxu0
        %450 = vmatprep.mubr.f32.mxu0 0.0
        %451 = vmatmul.mubr.f32.gmra.mrb[0].mxu0 %v379
        %v452 = vpop.f32.mrb[0].mxu0
        %v453 = vadd.f32 0.0, %v452
        %v454 = vpop.f32.mrb[0].mxu0
        %455 = vdwg.mxu0
        %v456 = vld [vmem:[%s294] sm:$0xff]
        %v457 = vld [vmem:[%s294 + $0x8] sm:$0xff]
        %458 = vmatprep.subr.mxu0 0.0
        %459 = vmatpush1.msra.mxu0 %v358
        %460 = vmatprep.subr.mxu0 0.0
        %461 = vmatpush1.msra.mxu0 %v359
        %462 = vmatprep.subr.mxu0 0.0
        %463 = vmatpush1.msra.mxu0 %v360
        %464 = vmatprep.subr.mxu0 0.0
        %465 = vmatpush1.msra.mxu0 %v361
        %466 = vmatprep.subr.mxu0 0.0
        %467 = vmatpush1.msra.mxu0 %v362
        %468 = vmatprep.subr.mxu0 0.0
        %469 = vmatpush1.msra.mxu0 %v363
        %470 = vmatprep.subr.mxu0 0.0
        %471 = vmatpush1.msra.mxu0 %v364
        %472 = vmatprep.subr.mxu0 0.0
        %473 = vmatpush1.msra.mxu0 %v365
        %474 = vmatprep.subr.mxu0 0.0
        %475 = vmatpush1.msra.mxu0 %v366
        %476 = vmatprep.subr.mxu0 0.0
        %477 = vmatpush1.msra.mxu0 %v367
        %478 = vmatprep.subr.mxu0 0.0
        %479 = vmatpush1.msra.mxu0 %v368
        %480 = vmatprep.subr.mxu0 0.0
        %481 = vmatpush1.msra.mxu0 %v369
        %482 = vmatprep.subr.mxu0 0.0
        %483 = vmatpush1.msra.mxu0 %v370
        %484 = vmatprep.subr.mxu0 0.0
        %485 = vmatpush1.msra.mxu0 %v371
        %486 = vmatprep.subr.mxu0 0.0
        %487 = vmatpush1.msra.mxu0 %v372
        %488 = vmatprep.subr.mxu0 0.0
        %489 = vmatpush1.msra.mxu0 %v373
        %490 = vmatprep.subr.mxu0 0.0
        %491 = vmatpush1.msra.mxu0 0.0
        %492 = vmatprep.subr.mxu0 0.0
        %493 = vmatpush1.msra.mxu0 0.0
        %494 = vmatprep.subr.mxu0 0.0
        %495 = vmatpush1.msra.mxu0 0.0
        %496 = vmatprep.subr.mxu0 0.0
        %497 = vmatpush1.msra.mxu0 0.0
        %498 = vmatprep.subr.mxu0 0.0
        %499 = vmatpush1.msra.mxu0 0.0
        %500 = vmatprep.subr.mxu0 0.0
        %501 = vmatpush1.msra.mxu0 0.0
        %502 = vmatprep.subr.mxu0 0.0
        %503 = vmatpush1.msra.mxu0 0.0
        %504 = vmatprep.subr.mxu0 0.0
        %505 = vmatpush1.msra.mxu0 0.0
        %506 = vmatprep.subr.mxu0 0.0
        %507 = vmatpush1.msra.mxu0 0.0
        %508 = vmatprep.subr.mxu0 0.0
        %509 = vmatpush1.msra.mxu0 0.0
        %510 = vmatprep.subr.mxu0 0.0
        %511 = vmatpush1.msra.mxu0 0.0
        %512 = vmatprep.subr.mxu0 0.0
        %513 = vmatpush1.msra.mxu0 0.0
        %514 = vmatprep.subr.mxu0 0.0
        %515 = vmatpush1.msra.mxu0 0.0
        %516 = vmatprep.subr.mxu0 0.0
        %517 = vmatpush1.msra.mxu0 0.0
        %518 = vmatprep.subr.mxu0 0.0
        %519 = vmatpush1.msra.mxu0 0.0
        %520 = vmatprep.subr.mxu0 0.0
        %521 = vmatpush1.msra.mxu0 0.0
        %522 = vmatprep.mubr.f32.mxu0 0.0
        %523 = vmatmul.mubr.f32.gmra.mrb[0].mxu0 %v456
        %v524 = vpop.f32.mrb[0].mxu0
        %v525 = vadd.f32 0.0, %v524
        %v526 = vpop.f32.mrb[0].mxu0
        %527 = vmatprep.mubr.f32.mxu0 0.0
        %528 = vmatmul.mubr.f32.gmra.mrb[0].mxu0 %v457
        %v529 = vpop.f32.mrb[0].mxu0
        %v530 = vadd.f32 0.0, %v529
        %v531 = vpop.f32.mrb[0].mxu0
        %532 = vdwg.mxu0
        %p533 = scmp.eq.s32.totalorder %s26, 0
        // Predicated region
        $region75: #{tpu_custom_call.1} parent=69 // pred_check
          %p534 = pneg %p533
        $region76: #{tpu_custom_call.1} parent=69 // pred_check_branch
          %536 = sbr.rel (%p534) target = $region78
        $region77: #{tpu_custom_call.1} parent=69 // pred_region
          %vm537 = vcmask 7168
          %538 = vst.msk [vmem:[#allocation2] sm:$0xff] %vm537, -inf
          %539 = vst.msk [vmem:[#allocation2 + $0x8] sm:$0xff] %vm537, -inf
          %540 = vst.msk [vmem:[#allocation3] sm:$0xff] %vm537, 0.0
          %541 = vst.msk [vmem:[#allocation3 + $0x8] sm:$0xff] %vm537, 0.0
          %vm542 = vcmask 269312
          %543 = vst.msk [vmem:[#allocation4] sm:$0xff] %vm542, 0.0
          %544 = vst.msk [vmem:[#allocation4 + $0x8] sm:$0xff] %vm542, 0.0
        $region78: #{tpu_custom_call.1} parent=69 // pred_fallthru
          _
        %v545 = vld [vmem:[#allocation4] sm:$0xff]
        %v546 = vld [vmem:[#allocation4 + $0x8] sm:$0xff]
        %v547 = vadd.f32 %v545, %v525
        %v548 = vadd.f32 %v546, %v530
        %vm549 = vcmask 269312
        %550 = vst.msk [vmem:[#allocation4] sm:$0xff] %vm549, %v547
        %551 = vst.msk [vmem:[#allocation4 + $0x8] sm:$0xff] %vm549, %v548
        %v552 = vld [vmem:[#allocation2] sm:$0xff]
        %v553 = vld [vmem:[#allocation2 + $0x8] sm:$0xff]
        %554 = vmax.xlane.f32.xlu0 %v448
        %v555 = vpop.xlane.xlu0 %554
        %556 = vmax.xlane.f32.xlu0 %v453
        %v557 = vpop.xlane.xlu0 %556
        %v558 = vmax.f32 %v552, %v555
        %v559 = vmax.f32 %v553, %v557
        %v560 = vsub.f32 %v552, %v558
        %v561 = vsub.f32 %v553, %v559
        %v562 = vmul.f32 %v560, 1.442695
        %v563 = vpow.pop %v562
        %v564 = vmul.f32 %v561, 1.442695
        %v565 = vpow.pop %v564
        %v566 = vld [vmem:[#allocation3] sm:$0xff]
        %v567 = vld [vmem:[#allocation3 + $0x8] sm:$0xff]
        %v568 = vmul.f32 %v563, %v566
        %v569 = vmul.f32 %v565, %v567
        %571 = vset.pattern.permute.xlu0 0
        %572 = vperm.xlu0 %571, %v558
        %v573 = vpop.permute.xlu0 %572
        %576 = vset.pattern.permute.xlu0 0
        %577 = vperm.xlu0 %576, %v559
        %v578 = vpop.permute.xlu0 %577
        %v580 = vsub.f32 %v448, %v573
        %v581 = vsub.f32 %v453, %v578
        %v582 = vmul.f32 %v580, 1.442695
        %v583 = vpow.pop %v582
        %v584 = vmul.f32 %v581, 1.442695
        %v585 = vpow.pop %v584
        %586 = vadd.xlane.f32.xlu0 %v583
        %v587 = vpop.xlane.xlu0 %586
        %588 = vadd.xlane.f32.xlu0 %v585
        %v589 = vpop.xlane.xlu0 %588
        %v590 = vadd.f32 %v568, %v587
        %v591 = vadd.f32 %v569, %v589
        %vm592 = vcmask 7168
        %593 = vst.msk [vmem:[#allocation3] sm:$0xff] %vm592, %v590
        %594 = vst.msk [vmem:[#allocation3 + $0x8] sm:$0xff] %vm592, %v591
        %595 = vst.msk [vmem:[#allocation2] sm:$0xff] %vm592, %v558
        %596 = vst.msk [vmem:[#allocation2 + $0x8] sm:$0xff] %vm592, %v559
        %p597 = scmp.eq.s32.totalorder %s26, 1
        // Predicated region
        $region79: #{tpu_custom_call.1} parent=69 // pred_check
          %p598 = pneg %p597
        $region80: #{tpu_custom_call.1} parent=69 // pred_check_branch
          %600 = sbr.rel (%p598) target = $region82
        $region81: #{tpu_custom_call.1} parent=69 // pred_region
          %v601 = vld [vmem:[#allocation2] sm:$0xff]
          %v602 = vld [vmem:[#allocation2 + $0x8] sm:$0xff]
          %v603 = vld [vmem:[#allocation3] sm:$0xff]
          %v604 = vld [vmem:[#allocation3 + $0x8] sm:$0xff]
          %v605 = vlog2.pop %v603
          %v606 = vmul.f32 %v605, 0.6931472
          %v607 = vlog2.pop %v604
          %v608 = vmul.f32 %v607, 0.6931472
          %v609 = vadd.f32 %v601, %v606
          %v610 = vadd.f32 %v602, %v608
          %v611 = vld [vmem:[#allocation4] sm:$0xff]
          %v612 = vld [vmem:[#allocation4 + $0x8] sm:$0xff]
          %v613 = vmul.f32 %v346, %v611
          %v614 = vmul.f32 %v347, %v612
          %v615 = vsel %vm374, %v613, 0.0
          %616 = vadd.xlane.f32.xlu0 %v615
          %v617 = vpop.xlane.xlu0 %616
          %v618 = vsel %vm374, %v614, 0.0
          %619 = vadd.xlane.f32.xlu0 %v618
          %v620 = vpop.xlane.xlu0 %619
          %623 = vrot.lane.b32.xlu0 %v609, 32
          %v624 = vpop.permute.xlu0 %623
          %625 = vrot.lane.b32.xlu0 %v610, 32
          %v626 = vpop.permute.xlu0 %625
          %v629 = vmul.f32 %v611, %v624
          %v630 = vmul.f32 %v612, %v626
          %v631 = vsub.f32 %v629, %v617
          %v632 = vsub.f32 %v630, %v620
          %635 = vrot.lane.b32.xlu0 %v631, 96
          %v636 = vpop.permute.xlu0 %635
          %637 = vrot.lane.b32.xlu0 %v632, 96
          %v638 = vpop.permute.xlu0 %637
          %v641 = vsel %vm592, %v636, 0.0
          %v642 = vsel %vm592, %v638, 0.0
          %v643 = vadd.f32 %v641, %v642
          %644 = vadd.xlane.f32.xlu0 %v643
          %v645 = vpop.xlane.xlu0 %644
          %v646 = vrot.slane %v645, 4
          %v647 = vadd.f32 %v645, %v646
          %v648 = vrot.slane %v647, 2
          %v649 = vadd.f32 %v647, %v648
          %v650 = vrot.slane %v649, 1
          %v651 = vadd.f32 %v649, %v650
          %s652 = vtos %v651
          %v653 = vstv %s652
          %vm654 = vcmask 0
          %655 = vst.msk [vmem:[%s340] sm:$0x1] %vm654, %v653
          %v656 = vsel %vm374, %v344, 0.0
          %v657 = vsel %vm374, %v345, 0.0
          %v658 = vadd.f32 %v656, %v657
          %v659 = vrot.slane %v658, 4
          %v660 = vadd.f32 %v658, %v659
          %v661 = vrot.slane %v660, 2
          %v662 = vadd.f32 %v660, %v661
          %v663 = vrot.slane %v662, 1
          %v664 = vadd.f32 %v662, %v663
          %vm665 = vcmask 253952
          %666 = vst.msk [vmem:[%s325] sm:$0x1] %vm665, %v664
          %v667 = vmul.f32 %v344, %v344
          %v668 = vmul.f32 %v345, %v345
          %v669 = vsel %vm374, %v667, 0.0
          %v670 = vsel %vm374, %v668, 0.0
          %v671 = vadd.f32 %v669, %v670
          %672 = vadd.xlane.f32.xlu0 %v671
          %v673 = vpop.xlane.xlu0 %672
          %v674 = vrot.slane %v673, 4
          %v675 = vadd.f32 %v673, %v674
          %v676 = vrot.slane %v675, 2
          %v677 = vadd.f32 %v675, %v676
          %v678 = vrot.slane %v677, 1
          %v679 = vadd.f32 %v677, %v678
          %s680 = vtos %v679
          %v681 = vstv %s680
          %682 = vst.msk [vmem:[%s343] sm:$0x1] %vm654, %v681
        $region82: #{tpu_custom_call.1} parent=69 // pred_fallthru
          _
        %p683 = scmp.lt.s32.totalorder %s25, 1
        %s684 = scalar_select %p683, %s25, 1
        %s685 = scalar_lea.vmem %s4, %s684
        %s686 = sand.u32 %s163, 1
        %s687 = scalar_lea.sflag [#allocation7], %s686
        %s688 = sand.u32 %s163, 1
        %s689 = scalar_lea.vmem [#allocation6], %s688
        %p690 = scmp.lt.s32.totalorder %s25, 1
        %s691 = scalar_select %p690, %s25, 1
        %s692 = scalar_lea.vmem %s6, %s691
        // Predicated region
        $region83: #{tpu_custom_call.1} parent=69 // pred_check
          %p693 = pneg %p147
        $region84: #{tpu_custom_call.1} parent=69 // pred_check_branch
          %695 = sbr.rel (%p693) target = $region86
        $region85: #{tpu_custom_call.1} parent=69 // pred_region
          _
        $region86: #{tpu_custom_call.1} parent=69 // pred_fallthru
          _
        // Predicated region
        $region87: #{tpu_custom_call.1} parent=69 // pred_check
          %p696 = pneg %p173
        $region88: #{tpu_custom_call.1} parent=69 // pred_check_branch
          %698 = sbr.rel (%p696) target = $region90
        $region89: #{tpu_custom_call.1} parent=69 // pred_region
          %s700 = ssub.s32 16, 16
          %701 = vsyncadd %s687, %s700
          %s702 = smul.addr %s25, 16
          %s703 = scalar_lea.hbm %s5, %s702
          %s705 = sshll.u32 %s689, 4
          %s706 = int_to_ptr.vmem [resolvable:$true] %s705
          %708 = dma.vmem_to_hbm [thread:$0]  %s706, 16, %s703, %s687
        $region90: #{tpu_custom_call.1} parent=69 // pred_fallthru
          _
        // Predicated region
        $region91: #{tpu_custom_call.1} parent=69 // pred_check
          %p709 = pneg %p199
        $region92: #{tpu_custom_call.1} parent=69 // pred_check_branch
          %711 = sbr.rel (%p709) target = $region94
        $region93: #{tpu_custom_call.1} parent=69 // pred_region
          _
        $region94: #{tpu_custom_call.1} parent=69 // pred_fallthru
          _
      $region70: #{tpu_custom_call.1} parent=5 // pred_fallthru
        _
      %p712 = scmp.le.s32.totalorder 2, %s16
      // Predicated region
      $region95: #{tpu_custom_call.1} parent=5 // pred_check
        %p713 = pneg %p712
      $region96: #{tpu_custom_call.1} parent=5 // pred_check_branch
        %715 = sbr.rel (%p713) target = $region98
      $region97: #{tpu_custom_call.1} parent=5 // pred_region
        %s716 = ssub.s32 %s16, 2
        // Predicated region
        $region99: #{tpu_custom_call.1} parent=97 // pred_check
          %p717 = pneg %p153
        $region100: #{tpu_custom_call.1} parent=97 // pred_check_branch
          %719 = sbr.rel (%p717) target = $region102
        $region101: #{tpu_custom_call.1} parent=97 // pred_region
          %p720 = scmp.lt.s32.totalorder %s27, 1
          %s721 = scalar_select %p720, %s27, 1
          %s722 = scalar_lea.vmem %s4, %s721
        $region102: #{tpu_custom_call.1} parent=97 // pred_fallthru
          _
        // Predicated region
        $region103: #{tpu_custom_call.1} parent=97 // pred_check
          %p723 = pneg %p179
        $region104: #{tpu_custom_call.1} parent=97 // pred_check_branch
          %725 = sbr.rel (%p723) target = $region106
        $region105: #{tpu_custom_call.1} parent=97 // pred_region
          %s726 = sand.u32 %s164, 1
          %s727 = scalar_lea.sflag [#allocation7], %s726
          %s728 = sand.u32 %s164, 1
          %s729 = scalar_lea.vmem [#allocation6], %s728
          %730 = dma.done %s727, 16
        $region106: #{tpu_custom_call.1} parent=97 // pred_fallthru
          _
        // Predicated region
        $region107: #{tpu_custom_call.1} parent=97 // pred_check
          %p731 = pneg %p205
        $region108: #{tpu_custom_call.1} parent=97 // pred_check_branch
          %733 = sbr.rel (%p731) target = $region110
        $region109: #{tpu_custom_call.1} parent=97 // pred_region
          %p734 = scmp.lt.s32.totalorder %s27, 1
          %s735 = scalar_select %p734, %s27, 1
          %s736 = scalar_lea.vmem %s6, %s735
        $region110: #{tpu_custom_call.1} parent=97 // pred_fallthru
          _
      $region98: #{tpu_custom_call.1} parent=5 // pred_fallthru
        _
    $region6: #{tpu_custom_call.1} parent=1 // loop_footer
      %s20 = sadd.s32 1, %s16
    $region7: #{tpu_custom_call.1} parent=1 // loop_footer_branch
      %15 = sbr.rel target = $region3
    $region8: #{tpu_custom_call.1} parent=1 // loop_exit
      _
    %737 = vsyncpa [#allocation7], 1
    %s738 = scalar_lea.sflag [#allocation7], 1
    %739 = vsyncpa %s738, 1

</llo_original>
